<compile_context>
chip_gen: v6e
topology: v6e:2x2x1
jax: 0.10.0
libtpu: 0.0.40
codegen_flags: <defaults>
</compile_context>

<pallas_src>
import functools

import jax
import jax.numpy as jnp
from jax import lax
from jax.experimental import pallas as pl
from jax.experimental.pallas import tpu as pltpu


def _context_kernel(x_ref, p_ref, m_ref, out_ref, *, H, W, K):
    # x_ref : (bpb, C, H*W)  io dtype (f32 or bf16), NCHW with (H,W) on lanes
    # p_ref : (C, 10+K+1)    f32 packed params: taps 0..8 | dw bias | ca w | ca b
    # m_ref : (4, H*W)       f32 border masks: has_left/right/top/bottom
    # out_ref: (bpb, C, H*W) io dtype
    bpb, C, HW = x_ref.shape
    pad = (K - 1) // 2
    inv_hw = 1.0 / float(HW)

    p = p_ref[...]                                   # (C, 10+K+1) f32
    wtap = [p[:, t:t + 1] for t in range(9)]         # 9 x (C,1), tap=(dy+1)*3+(dx+1)
    dwb = p[:, 9:10]                                 # (C,1) depthwise bias
    wk = [p[:, 10 + k:11 + k] for k in range(K)]     # K x (C,1) ca-conv weights (bcast)
    cab = p[:, 10 + K:11 + K]                        # (C,1) ca bias (bcast)

    m = m_ref[...]                                   # (4, HW) f32
    has_l, has_r = m[0:1], m[1:2]                    # valid-left / valid-right columns
    has_t, has_b = m[2:3], m[3:4]                    # valid-top / valid-bottom rows

    cidx = lax.broadcasted_iota(jnp.int32, (C, 1), 0)

    for b in range(bpb):                             # static unroll (small bpb)
        x = x_ref[b].astype(jnp.float32)             # (C, HW) f32 accumulation

        # ---- channel attention: GAP + Conv1d(1,1,K) along channels ----
        y = jnp.sum(x, axis=1, keepdims=True) * inv_hw           # (C,1)
        ca = cab
        for k in range(K):
            d = k - pad
            if d == 0:
                ys = y
            else:
                ys = pltpu.roll(y, shift=(-d) % C, axis=0)        # sublane roll
                if d > 0:
                    ys = jnp.where(cidx < C - d, ys, 0.0)
                else:
                    ys = jnp.where(cidx >= -d, ys, 0.0)
            ca = ca + wk[k] * ys

        # ---- depthwise 3x3, horizontal-then-vertical factorization ----
        xl = pltpu.roll(x, shift=1, axis=1) * has_l               # x[h, w-1]
        xr = pltpu.roll(x, shift=HW - 1, axis=1) * has_r          # x[h, w+1]

        q_m1 = wtap[0] * xl + wtap[1] * x + wtap[2] * xr          # dy = -1 row sums
        q_0  = wtap[3] * xl + wtap[4] * x + wtap[5] * xr          # dy =  0
        q_p1 = wtap[6] * xl + wtap[7] * x + wtap[8] * xr          # dy = +1

        acc = (dwb + ca) + q_0                                    # init with bias+ca
        acc = acc + pltpu.roll(q_m1, shift=W, axis=1) * has_t     # row h-1
        acc = acc + pltpu.roll(q_p1, shift=HW - W, axis=1) * has_b  # row h+1

        out_ref[b] = acc.astype(out_ref.dtype)


def context_forward(x_nchw, dw_weight, dw_bias, ca_weight, ca_bias,
                    *, max_block_bytes=4 << 20):
    """x_nchw (B,C,H,W) f32 or bf16; dw_weight (C,1,3,3); dw_bias (C,);
    ca_weight (1,1,K) (K odd); ca_bias (1,).  Returns (B,C,H,W) in x's dtype."""
    B, C, H, W = x_nchw.shape
    HW = H * W
    K = ca_weight.shape[-1]
    assert K % 2 == 1, "Conv1d channel attention requires an odd kernel size"

    io_dtype = jnp.bfloat16 if x_nchw.dtype == jnp.bfloat16 else jnp.float32
    x = x_nchw.astype(io_dtype).reshape(B, C, HW)     # free contiguous reshape

    # One packed lane-major parameter block: (C, 10+K+1).
    taps = dw_weight[:, 0, :, :].astype(jnp.float32).reshape(C, 9)   # tap = ky*3+kx
    params = jnp.concatenate([
        taps,
        dw_bias.astype(jnp.float32).reshape(C, 1),
        jnp.broadcast_to(ca_weight[0, 0].astype(jnp.float32)[None, :], (C, K)),
        jnp.broadcast_to(ca_bias.astype(jnp.float32).reshape(1, 1), (C, 1)),
    ], axis=1)                                        # (C, 10+K+1)
    ncol = params.shape[1]

    # Precomputed spatial border masks (no per-step integer div/mod in-kernel).
    pos = jnp.arange(HW, dtype=jnp.int32)
    h_pos, w_pos = pos // W, pos % W
    masks = jnp.stack([
        w_pos >= 1,          # has left neighbor
        w_pos <= W - 2,      # has right neighbor
        h_pos >= 1,          # has top neighbor
        h_pos <= H - 2,      # has bottom neighbor
    ]).astype(jnp.float32)                            # (4, HW)

    # Fold the whole batch into one grid step when the block is small
    # (kills per-step overhead on single-TC v5e/v6e); otherwise grid=(B,)
    # "parallel" so both v7x TensorCores get work.
    blk_bytes = B * C * HW * jnp.dtype(io_dtype).itemsize * 4  # in+out, dbl-buffered
    bpb = B if blk_bytes <= max_block_bytes else 1
    grid = (B // bpb,)

    kernel = functools.partial(_context_kernel, H=H, W=W, K=K)
    out = pl.pallas_call(
        kernel,
        out_shape=jax.ShapeDtypeStruct((B, C, HW), io_dtype),
        grid=grid,
        in_specs=[
            pl.BlockSpec((bpb, C, HW), lambda i: (i, 0, 0)),
            pl.BlockSpec((C, ncol), lambda i: (0, 0)),
            pl.BlockSpec((4, HW), lambda i: (0, 0)),
        ],
        out_specs=pl.BlockSpec((bpb, C, HW), lambda i: (i, 0, 0)),
        compiler_params=pltpu.CompilerParams(
            dimension_semantics=("parallel",)),
    )(x, params, masks)
    return out.reshape(B, C, H, W)


def _reference(x_nchw, dw_weight, dw_bias, ca_weight, ca_bias):
    # Pure-JAX reference mirroring the PyTorch context submodule (NCHW, f32).
    C = x_nchw.shape[1]
    sa = lax.conv_general_dilated(
        x_nchw, dw_weight, window_strides=(1, 1), padding=((1, 1), (1, 1)),
        dimension_numbers=("NCHW", "OIHW", "NCHW"),
        feature_group_count=C) + dw_bias[None, :, None, None]
    y = jnp.mean(x_nchw, axis=(2, 3))                 # (B, C)
    K = ca_weight.shape[-1]
    pad = (K - 1) // 2
    ypad = jnp.pad(y, ((0, 0), (pad, pad)))
    ca = ca_bias[0] + sum(ca_weight[0, 0, k] * ypad[:, k:k + C] for k in range(K))
    return sa + ca[:, :, None, None]


if __name__ == "__main__":
    key = jax.random.PRNGKey(0)
    k1, k2, k3, k4, k5 = jax.random.split(key, 5)

    B, C, H, W = 2, 24, 16, 16
    x = jax.random.normal(k1, (B, C, H, W), jnp.float32)
    dw_weight = 0.1 * jax.random.normal(k2, (C, 1, 3, 3), jnp.float32)
    dw_bias = 0.1 * jax.random.normal(k3, (C,), jnp.float32)
    ca_weight = 0.1 * jax.random.normal(k4, (1, 1, 3), jnp.float32)
    ca_bias = 0.1 * jax.random.normal(k5, (1,), jnp.float32)

    ref = _reference(x, dw_weight, dw_bias, ca_weight, ca_bias)

    # f32 path
    out = context_forward(x, dw_weight, dw_bias, ca_weight, ca_bias)
    out = jax.block_until_ready(out)
    assert out.shape == (B, C, H, W) and out.dtype == jnp.float32
    err = float(jnp.max(jnp.abs(out - ref)))
    assert jnp.allclose(out, ref, atol=1e-4, rtol=1e-4), f"f32 max abs err {err}"

    # bf16 I/O path (f32 accumulation inside the kernel)
    out_bf = context_forward(x.astype(jnp.bfloat16), dw_weight, dw_bias,
                             ca_weight, ca_bias)
    out_bf = jax.block_until_ready(out_bf)
    assert out_bf.dtype == jnp.bfloat16
    err_bf = float(jnp.max(jnp.abs(out_bf.astype(jnp.float32) - ref)))
    assert jnp.allclose(out_bf.astype(jnp.float32), ref, atol=1e-1, rtol=1e-1), \
        f"bf16 max abs err {err_bf}"

    print("KERNEL_OK")
</pallas_src>

<mosaic_0001>
module attributes {stable_mosaic.version = 11 : i64} {
  func.func @_context_kernel(%arg0: i32, %arg1: memref<2x24x256xf32, #tpu.memory_space<vmem>>, %arg2: memref<24x14xf32, #tpu.memory_space<vmem>>, %arg3: memref<4x256xf32, #tpu.memory_space<vmem>>, %arg4: memref<2x24x256xf32, #tpu.memory_space<vmem>>) attributes {dimension_semantics = [#tpu.dimension_semantics<parallel>], iteration_bounds = array<i64: 1>, scalar_prefetch = 0 : i64, scratch_operands = 0 : i64, tpu.core_type = #tpu.core_type<tc>, window_params = [{transform_indices = @transform_0, window_bounds = array<i64: 2, 24, 256>}, {pipeline_mode = #tpu.pipeline_mode<synchronous>, transform_indices = @transform_1, window_bounds = array<i64: 24, 14>}, {pipeline_mode = #tpu.pipeline_mode<synchronous>, transform_indices = @transform_2, window_bounds = array<i64: 4, 256>}, {transform_indices = @transform_3, window_bounds = array<i64: 2, 24, 256>}]} {
    %c0 = arith.constant 0 : index
    %c0_0 = arith.constant 0 : index
    %0 = vector.load %arg2[%c0, %c0_0] : memref<24x14xf32, #tpu.memory_space<vmem>>, vector<24x14xf32>
    %1 = vector.extract_strided_slice %0 {offsets = [0, 0], sizes = [24, 1], strides = [1, 1]} : vector<24x14xf32> to vector<24x1xf32>
    %2 = vector.extract_strided_slice %0 {offsets = [0, 1], sizes = [24, 1], strides = [1, 1]} : vector<24x14xf32> to vector<24x1xf32>
    %3 = vector.extract_strided_slice %0 {offsets = [0, 2], sizes = [24, 1], strides = [1, 1]} : vector<24x14xf32> to vector<24x1xf32>
    %4 = vector.extract_strided_slice %0 {offsets = [0, 3], sizes = [24, 1], strides = [1, 1]} : vector<24x14xf32> to vector<24x1xf32>
    %5 = vector.extract_strided_slice %0 {offsets = [0, 4], sizes = [24, 1], strides = [1, 1]} : vector<24x14xf32> to vector<24x1xf32>
    %6 = vector.extract_strided_slice %0 {offsets = [0, 5], sizes = [24, 1], strides = [1, 1]} : vector<24x14xf32> to vector<24x1xf32>
    %7 = vector.extract_strided_slice %0 {offsets = [0, 6], sizes = [24, 1], strides = [1, 1]} : vector<24x14xf32> to vector<24x1xf32>
    %8 = vector.extract_strided_slice %0 {offsets = [0, 7], sizes = [24, 1], strides = [1, 1]} : vector<24x14xf32> to vector<24x1xf32>
    %9 = vector.extract_strided_slice %0 {offsets = [0, 8], sizes = [24, 1], strides = [1, 1]} : vector<24x14xf32> to vector<24x1xf32>
    %10 = vector.extract_strided_slice %0 {offsets = [0, 9], sizes = [24, 1], strides = [1, 1]} : vector<24x14xf32> to vector<24x1xf32>
    %11 = vector.extract_strided_slice %0 {offsets = [0, 10], sizes = [24, 1], strides = [1, 1]} : vector<24x14xf32> to vector<24x1xf32>
    %12 = vector.extract_strided_slice %0 {offsets = [0, 11], sizes = [24, 1], strides = [1, 1]} : vector<24x14xf32> to vector<24x1xf32>
    %13 = vector.extract_strided_slice %0 {offsets = [0, 12], sizes = [24, 1], strides = [1, 1]} : vector<24x14xf32> to vector<24x1xf32>
    %14 = vector.extract_strided_slice %0 {offsets = [0, 13], sizes = [24, 1], strides = [1, 1]} : vector<24x14xf32> to vector<24x1xf32>
    %c0_1 = arith.constant 0 : index
    %c0_2 = arith.constant 0 : index
    %15 = vector.load %arg3[%c0_1, %c0_2] : memref<4x256xf32, #tpu.memory_space<vmem>>, vector<4x256xf32>
    %16 = vector.extract_strided_slice %15 {offsets = [0, 0], sizes = [1, 256], strides = [1, 1]} : vector<4x256xf32> to vector<1x256xf32>
    %17 = vector.extract_strided_slice %15 {offsets = [1, 0], sizes = [1, 256], strides = [1, 1]} : vector<4x256xf32> to vector<1x256xf32>
    %18 = vector.extract_strided_slice %15 {offsets = [2, 0], sizes = [1, 256], strides = [1, 1]} : vector<4x256xf32> to vector<1x256xf32>
    %19 = vector.extract_strided_slice %15 {offsets = [3, 0], sizes = [1, 256], strides = [1, 1]} : vector<4x256xf32> to vector<1x256xf32>
    %20 = tpu.iota {dimensions = array<i32: 0>} : vector<24x1xi32>
    %c0_3 = arith.constant 0 : index
    %c0_4 = arith.constant 0 : index
    %c0_5 = arith.constant 0 : index
    %21 = vector.load %arg1[%c0_3, %c0_4, %c0_5] : memref<2x24x256xf32, #tpu.memory_space<vmem>>, vector<1x24x256xf32>
    %22 = vector.shape_cast %21 : vector<1x24x256xf32> to vector<24x256xf32>
    %cst = arith.constant dense<0.000000e+00> : vector<24xf32>
    %23 = vector.multi_reduction <add>, %22, %cst [1] : vector<24x256xf32> to vector<24xf32>
    %24 = vector.shape_cast %23 : vector<24xf32> to vector<24x1xf32>
    %cst_6 = arith.constant 3.906250e-03 : f32
    %25 = vector.broadcast %cst_6 : f32 to vector<24x1xf32>
    %26 = arith.mulf %24, %25 : vector<24x1xf32>
    %c1_i32 = arith.constant 1 : i32
    %27 = tpu.dynamic_rotate %26 by %c1_i32 dim 0 : vector<24x1xf32>, i32 -> vector<24x1xf32>
    %c1_i32_7 = arith.constant 1 : i32
    %28 = vector.broadcast %c1_i32_7 : i32 to vector<24x1xi32>
    %29 = arith.cmpi sge, %20, %28 : vector<24x1xi32>
    %cst_8 = arith.constant 0.000000e+00 : f32
    %30 = vector.broadcast %cst_8 : f32 to vector<24x1xf32>
    %31 = arith.select %29, %27, %30 : vector<24x1xi1>, vector<24x1xf32>
    %32 = arith.mulf %11, %31 : vector<24x1xf32>
    %33 = arith.addf %14, %32 : vector<24x1xf32>
    %34 = arith.mulf %12, %26 : vector<24x1xf32>
    %35 = arith.addf %33, %34 : vector<24x1xf32>
    %c23_i32 = arith.constant 23 : i32
    %36 = tpu.dynamic_rotate %26 by %c23_i32 dim 0 : vector<24x1xf32>, i32 -> vector<24x1xf32>
    %c23_i32_9 = arith.constant 23 : i32
    %37 = vector.broadcast %c23_i32_9 : i32 to vector<24x1xi32>
    %38 = arith.cmpi slt, %20, %37 : vector<24x1xi32>
    %cst_10 = arith.constant 0.000000e+00 : f32
    %39 = vector.broadcast %cst_10 : f32 to vector<24x1xf32>
    %40 = arith.select %38, %36, %39 : vector<24x1xi1>, vector<24x1xf32>
    %41 = arith.mulf %13, %40 : vector<24x1xf32>
    %42 = arith.addf %35, %41 : vector<24x1xf32>
    %c1_i32_11 = arith.constant 1 : i32
    %43 = tpu.dynamic_rotate %22 by %c1_i32_11 dim 1 : vector<24x256xf32>, i32 -> vector<24x256xf32>
    %44 = vector.broadcast %16 : vector<1x256xf32> to vector<24x256xf32>
    %45 = arith.mulf %43, %44 : vector<24x256xf32>
    %c255_i32 = arith.constant 255 : i32
    %46 = tpu.dynamic_rotate %22 by %c255_i32 dim 1 : vector<24x256xf32>, i32 -> vector<24x256xf32>
    %47 = vector.broadcast %17 : vector<1x256xf32> to vector<24x256xf32>
    %48 = arith.mulf %46, %47 : vector<24x256xf32>
    %49 = vector.broadcast %1 : vector<24x1xf32> to vector<24x256xf32>
    %50 = arith.mulf %49, %45 : vector<24x256xf32>
    %51 = vector.broadcast %2 : vector<24x1xf32> to vector<24x256xf32>
    %52 = arith.mulf %51, %22 : vector<24x256xf32>
    %53 = arith.addf %50, %52 : vector<24x256xf32>
    %54 = vector.broadcast %3 : vector<24x1xf32> to vector<24x256xf32>
    %55 = arith.mulf %54, %48 : vector<24x256xf32>
    %56 = arith.addf %53, %55 : vector<24x256xf32>
    %57 = vector.broadcast %4 : vector<24x1xf32> to vector<24x256xf32>
    %58 = arith.mulf %57, %45 : vector<24x256xf32>
    %59 = vector.broadcast %5 : vector<24x1xf32> to vector<24x256xf32>
    %60 = arith.mulf %59, %22 : vector<24x256xf32>
    %61 = arith.addf %58, %60 : vector<24x256xf32>
    %62 = vector.broadcast %6 : vector<24x1xf32> to vector<24x256xf32>
    %63 = arith.mulf %62, %48 : vector<24x256xf32>
    %64 = arith.addf %61, %63 : vector<24x256xf32>
    %65 = vector.broadcast %7 : vector<24x1xf32> to vector<24x256xf32>
    %66 = arith.mulf %65, %45 : vector<24x256xf32>
    %67 = vector.broadcast %8 : vector<24x1xf32> to vector<24x256xf32>
    %68 = arith.mulf %67, %22 : vector<24x256xf32>
    %69 = arith.addf %66, %68 : vector<24x256xf32>
    %70 = vector.broadcast %9 : vector<24x1xf32> to vector<24x256xf32>
    %71 = arith.mulf %70, %48 : vector<24x256xf32>
    %72 = arith.addf %69, %71 : vector<24x256xf32>
    %73 = arith.addf %10, %42 : vector<24x1xf32>
    %74 = vector.broadcast %73 : vector<24x1xf32> to vector<24x256xf32>
    %75 = arith.addf %74, %64 : vector<24x256xf32>
    %c16_i32 = arith.constant 16 : i32
    %76 = tpu.dynamic_rotate %56 by %c16_i32 dim 1 : vector<24x256xf32>, i32 -> vector<24x256xf32>
    %77 = vector.broadcast %18 : vector<1x256xf32> to vector<24x256xf32>
    %78 = arith.mulf %76, %77 : vector<24x256xf32>
    %79 = arith.addf %75, %78 : vector<24x256xf32>
    %c240_i32 = arith.constant 240 : i32
    %80 = tpu.dynamic_rotate %72 by %c240_i32 dim 1 : vector<24x256xf32>, i32 -> vector<24x256xf32>
    %81 = vector.broadcast %19 : vector<1x256xf32> to vector<24x256xf32>
    %82 = arith.mulf %80, %81 : vector<24x256xf32>
    %83 = arith.addf %79, %82 : vector<24x256xf32>
    %c0_12 = arith.constant 0 : index
    %c0_13 = arith.constant 0 : index
    %c0_14 = arith.constant 0 : index
    %84 = vector.load %arg4[%c0_12, %c0_13, %c0_14] : memref<2x24x256xf32, #tpu.memory_space<vmem>>, vector<1x24x256xf32>
    %85 = vector.shape_cast %84 : vector<1x24x256xf32> to vector<24x256xf32>
    %86 = vector.shape_cast %83 : vector<24x256xf32> to vector<1x24x256xf32>
    tpu.vector_store %arg4[%c0_12, %c0_13, %c0_14], %86 {strides = array<i32>} : memref<2x24x256xf32, #tpu.memory_space<vmem>>, vector<1x24x256xf32>,
    %c1 = arith.constant 1 : index
    %c0_15 = arith.constant 0 : index
    %c0_16 = arith.constant 0 : index
    %87 = vector.load %arg1[%c1, %c0_15, %c0_16] : memref<2x24x256xf32, #tpu.memory_space<vmem>>, vector<1x24x256xf32>
    %88 = vector.shape_cast %87 : vector<1x24x256xf32> to vector<24x256xf32>
    %cst_17 = arith.constant dense<0.000000e+00> : vector<24xf32>
    %89 = vector.multi_reduction <add>, %88, %cst_17 [1] : vector<24x256xf32> to vector<24xf32>
    %90 = vector.shape_cast %89 : vector<24xf32> to vector<24x1xf32>
    %cst_18 = arith.constant 3.906250e-03 : f32
    %91 = vector.broadcast %cst_18 : f32 to vector<24x1xf32>
    %92 = arith.mulf %90, %91 : vector<24x1xf32>
    %c1_i32_19 = arith.constant 1 : i32
    %93 = tpu.dynamic_rotate %92 by %c1_i32_19 dim 0 : vector<24x1xf32>, i32 -> vector<24x1xf32>
    %c1_i32_20 = arith.constant 1 : i32
    %94 = vector.broadcast %c1_i32_20 : i32 to vector<24x1xi32>
    %95 = arith.cmpi sge, %20, %94 : vector<24x1xi32>
    %cst_21 = arith.constant 0.000000e+00 : f32
    %96 = vector.broadcast %cst_21 : f32 to vector<24x1xf32>
    %97 = arith.select %95, %93, %96 : vector<24x1xi1>, vector<24x1xf32>
    %98 = arith.mulf %11, %97 : vector<24x1xf32>
    %99 = arith.addf %14, %98 : vector<24x1xf32>
    %100 = arith.mulf %12, %92 : vector<24x1xf32>
    %101 = arith.addf %99, %100 : vector<24x1xf32>
    %c23_i32_22 = arith.constant 23 : i32
    %102 = tpu.dynamic_rotate %92 by %c23_i32_22 dim 0 : vector<24x1xf32>, i32 -> vector<24x1xf32>
    %c23_i32_23 = arith.constant 23 : i32
    %103 = vector.broadcast %c23_i32_23 : i32 to vector<24x1xi32>
    %104 = arith.cmpi slt, %20, %103 : vector<24x1xi32>
    %cst_24 = arith.constant 0.000000e+00 : f32
    %105 = vector.broadcast %cst_24 : f32 to vector<24x1xf32>
    %106 = arith.select %104, %102, %105 : vector<24x1xi1>, vector<24x1xf32>
    %107 = arith.mulf %13, %106 : vector<24x1xf32>
    %108 = arith.addf %101, %107 : vector<24x1xf32>
    %c1_i32_25 = arith.constant 1 : i32
    %109 = tpu.dynamic_rotate %88 by %c1_i32_25 dim 1 : vector<24x256xf32>, i32 -> vector<24x256xf32>
    %110 = vector.broadcast %16 : vector<1x256xf32> to vector<24x256xf32>
    %111 = arith.mulf %109, %110 : vector<24x256xf32>
    %c255_i32_26 = arith.constant 255 : i32
    %112 = tpu.dynamic_rotate %88 by %c255_i32_26 dim 1 : vector<24x256xf32>, i32 -> vector<24x256xf32>
    %113 = vector.broadcast %17 : vector<1x256xf32> to vector<24x256xf32>
    %114 = arith.mulf %112, %113 : vector<24x256xf32>
    %115 = vector.broadcast %1 : vector<24x1xf32> to vector<24x256xf32>
    %116 = arith.mulf %115, %111 : vector<24x256xf32>
    %117 = vector.broadcast %2 : vector<24x1xf32> to vector<24x256xf32>
    %118 = arith.mulf %117, %88 : vector<24x256xf32>
    %119 = arith.addf %116, %118 : vector<24x256xf32>
    %120 = vector.broadcast %3 : vector<24x1xf32> to vector<24x256xf32>
    %121 = arith.mulf %120, %114 : vector<24x256xf32>
    %122 = arith.addf %119, %121 : vector<24x256xf32>
    %123 = vector.broadcast %4 : vector<24x1xf32> to vector<24x256xf32>
    %124 = arith.mulf %123, %111 : vector<24x256xf32>
    %125 = vector.broadcast %5 : vector<24x1xf32> to vector<24x256xf32>
    %126 = arith.mulf %125, %88 : vector<24x256xf32>
    %127 = arith.addf %124, %126 : vector<24x256xf32>
    %128 = vector.broadcast %6 : vector<24x1xf32> to vector<24x256xf32>
    %129 = arith.mulf %128, %114 : vector<24x256xf32>
    %130 = arith.addf %127, %129 : vector<24x256xf32>
    %131 = vector.broadcast %7 : vector<24x1xf32> to vector<24x256xf32>
    %132 = arith.mulf %131, %111 : vector<24x256xf32>
    %133 = vector.broadcast %8 : vector<24x1xf32> to vector<24x256xf32>
    %134 = arith.mulf %133, %88 : vector<24x256xf32>
    %135 = arith.addf %132, %134 : vector<24x256xf32>
    %136 = vector.broadcast %9 : vector<24x1xf32> to vector<24x256xf32>
    %137 = arith.mulf %136, %114 : vector<24x256xf32>
    %138 = arith.addf %135, %137 : vector<24x256xf32>
    %139 = arith.addf %10, %108 : vector<24x1xf32>
    %140 = vector.broadcast %139 : vector<24x1xf32> to vector<24x256xf32>
    %141 = arith.addf %140, %130 : vector<24x256xf32>
    %c16_i32_27 = arith.constant 16 : i32
    %142 = tpu.dynamic_rotate %122 by %c16_i32_27 dim 1 : vector<24x256xf32>, i32 -> vector<24x256xf32>
    %143 = vector.broadcast %18 : vector<1x256xf32> to vector<24x256xf32>
    %144 = arith.mulf %142, %143 : vector<24x256xf32>
    %145 = arith.addf %141, %144 : vector<24x256xf32>
    %c240_i32_28 = arith.constant 240 : i32
    %146 = tpu.dynamic_rotate %138 by %c240_i32_28 dim 1 : vector<24x256xf32>, i32 -> vector<24x256xf32>
    %147 = vector.broadcast %19 : vector<1x256xf32> to vector<24x256xf32>
    %148 = arith.mulf %146, %147 : vector<24x256xf32>
    %149 = arith.addf %145, %148 : vector<24x256xf32>
    %c1_29 = arith.constant 1 : index
    %c0_30 = arith.constant 0 : index
    %c0_31 = arith.constant 0 : index
    %150 = vector.load %arg4[%c1_29, %c0_30, %c0_31] : memref<2x24x256xf32, #tpu.memory_space<vmem>>, vector<1x24x256xf32>
    %151 = vector.shape_cast %150 : vector<1x24x256xf32> to vector<24x256xf32>
    %152 = vector.shape_cast %149 : vector<24x256xf32> to vector<1x24x256xf32>
    tpu.vector_store %arg4[%c1_29, %c0_30, %c0_31], %152 {strides = array<i32>} : memref<2x24x256xf32, #tpu.memory_space<vmem>>, vector<1x24x256xf32>,
    return
  }
  func.func @transform_0(%arg0: i32) -> (i32, i32, i32) {
    %c0_i32 = arith.constant 0 : i32
    %c0_i32_0 = arith.constant 0 : i32
    %c0_i32_1 = arith.constant 0 : i32
    return %arg0, %c0_i32, %c0_i32_0 : i32, i32, i32
  }
  func.func @transform_1(%arg0: i32) -> (i32, i32) {
    %c0_i32 = arith.constant 0 : i32
    %c0_i32_0 = arith.constant 0 : i32
    %c0_i32_1 = arith.constant 0 : i32
    return %c0_i32, %c0_i32_0 : i32, i32
  }
  func.func @transform_2(%arg0: i32) -> (i32, i32) {
    %c0_i32 = arith.constant 0 : i32
    %c0_i32_0 = arith.constant 0 : i32
    %c0_i32_1 = arith.constant 0 : i32
    return %c0_i32, %c0_i32_0 : i32, i32
  }
  func.func @transform_3(%arg0: i32) -> (i32, i32, i32) {
    %c0_i32 = arith.constant 0 : i32
    %c0_i32_0 = arith.constant 0 : i32
    %c0_i32_1 = arith.constant 0 : i32
    return %arg0, %c0_i32, %c0_i32_0 : i32, i32, i32
  }
}

</mosaic_0001>

<llo_original>
// kernel: tpu_custom_call.1
$region0: #{tpu_custom_call.1}
  #allocation0 [shape = 'u32[]', space=smem, size = 0x4, offset = 0x4, fixed_abs, tag = 'smem constant byte address 0x4 - core index']
  #allocation1 [shape = 'u32[144,128]{1,0:T(1,128)}', space=vmem, size = 0x12000, scoped, tag = 'internal scratch']
  %s0 = inlined_call_operand.hbm [shape: f32[2,24,256], index: 0, kind: input, shape index: {}]
  %s1 = inlined_call_operand.vmem [shape: f32[24,14], index: 1, kind: input, shape index: {}]
  %s2 = inlined_call_operand.vmem [shape: f32[4,256], index: 2, kind: input, shape index: {}]
  %s3 = inlined_call_operand.hbm [shape: f32[2,24,256], index: 3, kind: output, shape index: {}]
  %s4 = sld [smem:[#allocation0]]
  $region26: #{tpu_custom_call.1} parent=0
    _
  %s6 = ssub.s32 1, %s4
  %s7 = scalar_select 0, %s6, %s4
  $region1: #{tpu_custom_call.1} parent=0
    #allocation2 [shape = 'u8[49152]{0}', space=vmem, size = 0xc000, scoped, tag = 'input window, operand 0, single buffered']
    #allocation3 [shape = 's32[1]{0}', space=sflag, size = 0x4, scoped, tag = 'scoped memory for tpu_custom_call.1']
    #allocation4 [shape = 's32[1]{0}', space=sflag, size = 0x4, scoped, tag = 'scoped memory for tpu_custom_call.1']
    #allocation5 [shape = 'u8[49152]{0}', space=vmem, size = 0xc000, scoped, tag = 'output window, operand 0, single buffered']
    %8 = vsyncpa [#allocation3], 0
    %9 = vsyncpa [#allocation4], 0
    // Predicated region
    $region2: #{tpu_custom_call.1} parent=1 // pred_check
      _
    $region3: #{tpu_custom_call.1} parent=1 // pred_check_branch
      %11 = sbr.rel (0) target = $region5
    $region4: #{tpu_custom_call.1} parent=1 // pred_region
      %s13 = ssub.s32 1536, 1536
      %14 = vsyncadd [#allocation3], %s13
      %s15 = sshll.u32 [#allocation2], 4
      %s16 = int_to_ptr.vmem [resolvable:$true] %s15
      %21 = dma.hbm_to_vmem [thread:$0]  %s0, 1536, %s16, [#allocation3], 256, 256, 16
    $region5: #{tpu_custom_call.1} parent=1 // pred_fallthru
      _
    // Predicated region
    $region6: #{tpu_custom_call.1} parent=1 // pred_check
      _
    $region7: #{tpu_custom_call.1} parent=1 // pred_check_branch
      %23 = sbr.rel (0) target = $region9
    $region8: #{tpu_custom_call.1} parent=1 // pred_region
      _
    $region9: #{tpu_custom_call.1} parent=1 // pred_fallthru
      _
    // Predicated region
    $region10: #{tpu_custom_call.1} parent=1 // pred_check
      _
    $region11: #{tpu_custom_call.1} parent=1 // pred_check_branch
      %25 = sbr.rel (0) target = $region13
    $region12: #{tpu_custom_call.1} parent=1 // pred_region
      _
    $region13: #{tpu_custom_call.1} parent=1 // pred_fallthru
      _
    // Predicated region
    $region14: #{tpu_custom_call.1} parent=1 // pred_check
      _
    $region15: #{tpu_custom_call.1} parent=1 // pred_check_branch
      %27 = sbr.rel (0) target = $region17
    $region16: #{tpu_custom_call.1} parent=1 // pred_region
      %28 = dma.done [#allocation3], 1536
    $region17: #{tpu_custom_call.1} parent=1 // pred_fallthru
      _
    %v29 = vld [vmem:[%s1] sm:$0xff]
    %v30 = vld [vmem:[%s1 + $0x8] sm:$0xff]
    %v31 = vld [vmem:[%s1 + $0x10] sm:$0xff]
    %v32 = vld [vmem:[%s2] sm:$0xff]
    %v33 = vlaneseq
    %v34 = vshrl.u32 %v33, 7
    %v35 = vadd.s32 %v34, 8
    %v36 = vadd.s32 %v34, 16
    %v37 = vld [vmem:[#allocation2] sm:$0xff]
    %v38 = vld [vmem:[#allocation2 + $0x8] sm:$0xff]
    %v39 = vld [vmem:[#allocation2 + $0x10] sm:$0xff]
    %v40 = vld [vmem:[#allocation2 + $0x18] sm:$0xff]
    %v41 = vld [vmem:[#allocation2 + $0x20] sm:$0xff]
    %v42 = vld [vmem:[#allocation2 + $0x28] sm:$0xff]
    %v43 = vadd.f32 %v37, %v38
    %44 = vadd.xlane.f32.xlu0 %v43
    %v45 = vpop.xlane.xlu0 %44
    %v46 = vadd.f32 %v39, %v40
    %47 = vadd.xlane.f32.xlu0 %v46
    %v48 = vpop.xlane.xlu0 %47
    %v49 = vadd.f32 %v41, %v42
    %50 = vadd.xlane.f32.xlu0 %v49
    %v51 = vpop.xlane.xlu0 %50
    %v52 = vmul.f32 %v45, 0.00390625
    %v53 = vmul.f32 %v48, 0.00390625
    %v54 = vmul.f32 %v51, 0.00390625
    %v55 = vrot.slane %v52, 7
    %v56 = vrot.slane %v53, 7
    %v57 = vrot.slane %v54, 7
    %vm58 = vcmp.lt.s32.totalorder %v34, 1
    %v59 = vsel %vm58, %v56, %v57
    %v60 = vsel %vm58, %v55, %v56
    %v61 = vsel %vm58, %v57, %v55
    %vm62 = vcmp.ge.s32.totalorder %v34, 1
    %vm63 = vcmp.ge.s32.totalorder %v35, 1
    %vm64 = vcmp.ge.s32.totalorder %v36, 1
    %v65 = vsel %vm62, %v61, 0.0
    %v66 = vsel %vm63, %v60, 0.0
    %v67 = vsel %vm64, %v59, 0.0
    %71 = vrot.lane.b32.xlu0 %v65, 10
    %v72 = vpop.permute.xlu0 %71
    %73 = vrot.lane.b32.xlu0 %v66, 10
    %v74 = vpop.permute.xlu0 %73
    %75 = vrot.lane.b32.xlu0 %v67, 10
    %v76 = vpop.permute.xlu0 %75
    %v80 = vmul.f32 %v29, %v72
    %v81 = vmul.f32 %v30, %v74
    %v82 = vmul.f32 %v31, %v76
    %86 = vrot.lane.b32.xlu0 %v80, 3
    %v87 = vpop.permute.xlu0 %86
    %88 = vrot.lane.b32.xlu0 %v81, 3
    %v89 = vpop.permute.xlu0 %88
    %90 = vrot.lane.b32.xlu0 %v82, 3
    %v91 = vpop.permute.xlu0 %90
    %v95 = vadd.f32 %v29, %v87
    %v96 = vadd.f32 %v30, %v89
    %v97 = vadd.f32 %v31, %v91
    %v98 = vmul.f32 %v29, %v52
    %v99 = vmul.f32 %v30, %v53
    %v100 = vmul.f32 %v31, %v54
    %104 = vrot.lane.b32.xlu0 %v98, 2
    %v105 = vpop.permute.xlu0 %104
    %106 = vrot.lane.b32.xlu0 %v99, 2
    %v107 = vpop.permute.xlu0 %106
    %108 = vrot.lane.b32.xlu0 %v100, 2
    %v109 = vpop.permute.xlu0 %108
    %v113 = vadd.f32 %v95, %v105
    %v114 = vadd.f32 %v96, %v107
    %v115 = vadd.f32 %v97, %v109
    %v116 = vrot.slane %v52, 1
    %v117 = vrot.slane %v53, 1
    %v118 = vrot.slane %v54, 1
    %vm119 = vcmp.lt.s32.totalorder %v34, 7
    %v120 = vsel %vm119, %v117, %v118
    %v121 = vsel %vm119, %v116, %v117
    %v122 = vsel %vm119, %v118, %v116
    %vm123 = vcmp.lt.s32.totalorder %v34, 23
    %vm124 = vcmp.lt.s32.totalorder %v35, 23
    %vm125 = vcmp.lt.s32.totalorder %v36, 23
    %v126 = vsel %vm123, %v121, 0.0
    %v127 = vsel %vm124, %v120, 0.0
    %v128 = vsel %vm125, %v122, 0.0
    %132 = vrot.lane.b32.xlu0 %v126, 12
    %v133 = vpop.permute.xlu0 %132
    %134 = vrot.lane.b32.xlu0 %v127, 12
    %v135 = vpop.permute.xlu0 %134
    %136 = vrot.lane.b32.xlu0 %v128, 12
    %v137 = vpop.permute.xlu0 %136
    %v141 = vmul.f32 %v29, %v133
    %v142 = vmul.f32 %v30, %v135
    %v143 = vmul.f32 %v31, %v137
    %147 = vrot.lane.b32.xlu0 %v141, 1
    %v148 = vpop.permute.xlu0 %147
    %149 = vrot.lane.b32.xlu0 %v142, 1
    %v150 = vpop.permute.xlu0 %149
    %151 = vrot.lane.b32.xlu0 %v143, 1
    %v152 = vpop.permute.xlu0 %151
    %v156 = vadd.f32 %v113, %v148
    %v157 = vadd.f32 %v114, %v150
    %v158 = vadd.f32 %v115, %v152
    %159 = vrot.lane.b32.xlu0 %v37, 1
    %v160 = vpop.permute.xlu0 %159
    %161 = vrot.lane.b32.xlu0 %v39, 1
    %v162 = vpop.permute.xlu0 %161
    %163 = vrot.lane.b32.xlu0 %v41, 1
    %v164 = vpop.permute.xlu0 %163
    %165 = vrot.lane.b32.xlu0 %v38, 1
    %v166 = vpop.permute.xlu0 %165
    %167 = vrot.lane.b32.xlu0 %v40, 1
    %v168 = vpop.permute.xlu0 %167
    %169 = vrot.lane.b32.xlu0 %v42, 1
    %v170 = vpop.permute.xlu0 %169
    %v171 = vlaneseq
    %v172 = vand.u32 %v171, 127
    %vm173 = vcmp.lt.s32.totalorder %v172, 1
    %v174 = vsel %vm173, %v160, %v166
    %v175 = vsel %vm173, %v162, %v168
    %v176 = vsel %vm173, %v164, %v170
    %v177 = vsel %vm173, %v166, %v160
    %v178 = vsel %vm173, %v168, %v162
    %v179 = vsel %vm173, %v170, %v164
    %v181 = vlaneseq
    %v182 = vshrl.u32 %v181, 7
    %v183 = vsub.s32 0, %v182
    %v184 = vrot.slane %v32, %v183
    %v185 = vlaneseq
    %v186 = vshrl.u32 %v185, 7
    %v187 = vsub.s32 4, %v186
    %v188 = vrot.slane %v32, %v187
    %v191 = vlaneseq
    %v192 = vshrl.u32 %v191, 7
    %v193 = vsub.s32 0, %v192
    %v194 = vrot.slane %v184, %v193
    %v195 = vlaneseq
    %v196 = vshrl.u32 %v195, 7
    %v197 = vsub.s32 0, %v196
    %v198 = vrot.slane %v188, %v197
    %v199 = vmul.f32 %v177, %v194
    %v200 = vmul.f32 %v174, %v198
    %v201 = vmul.f32 %v178, %v194
    %v202 = vmul.f32 %v175, %v198
    %v203 = vmul.f32 %v179, %v194
    %v204 = vmul.f32 %v176, %v198
    %205 = vrot.lane.b32.xlu0 %v37, 127
    %v206 = vpop.permute.xlu0 %205
    %207 = vrot.lane.b32.xlu0 %v39, 127
    %v208 = vpop.permute.xlu0 %207
    %209 = vrot.lane.b32.xlu0 %v41, 127
    %v210 = vpop.permute.xlu0 %209
    %211 = vrot.lane.b32.xlu0 %v38, 127
    %v212 = vpop.permute.xlu0 %211
    %213 = vrot.lane.b32.xlu0 %v40, 127
    %v214 = vpop.permute.xlu0 %213
    %215 = vrot.lane.b32.xlu0 %v42, 127
    %v216 = vpop.permute.xlu0 %215
    %vm217 = vcmp.lt.s32.totalorder %v172, 127
    %v218 = vsel %vm217, %v206, %v212
    %v219 = vsel %vm217, %v208, %v214
    %v220 = vsel %vm217, %v210, %v216
    %v221 = vsel %vm217, %v212, %v206
    %v222 = vsel %vm217, %v214, %v208
    %v223 = vsel %vm217, %v216, %v210
    %v224 = vlaneseq
    %v225 = vshrl.u32 %v224, 7
    %v226 = vsub.s32 1, %v225
    %v227 = vrot.slane %v32, %v226
    %v228 = vlaneseq
    %v229 = vshrl.u32 %v228, 7
    %v230 = vsub.s32 5, %v229
    %v231 = vrot.slane %v32, %v230
    %v234 = vlaneseq
    %v235 = vshrl.u32 %v234, 7
    %v236 = vsub.s32 1, %v235
    %v237 = vrot.slane %v227, %v236
    %v238 = vlaneseq
    %v239 = vshrl.u32 %v238, 7
    %v240 = vsub.s32 1, %v239
    %v241 = vrot.slane %v231, %v240
    %v242 = vmul.f32 %v218, %v237
    %v243 = vmul.f32 %v221, %v241
    %v244 = vmul.f32 %v219, %v237
    %v245 = vmul.f32 %v222, %v241
    %v246 = vmul.f32 %v220, %v237
    %v247 = vmul.f32 %v223, %v241
    %249 = vset.pattern.permute.xlu0 0
    %250 = vperm.xlu0 %249, %v29
    %v251 = vpop.permute.xlu0 %250
    %254 = vset.pattern.permute.xlu0 0
    %255 = vperm.xlu0 %254, %v30
    %v256 = vpop.permute.xlu0 %255
    %259 = vset.pattern.permute.xlu0 0
    %260 = vperm.xlu0 %259, %v31
    %v261 = vpop.permute.xlu0 %260
    %v263 = vmul.f32 %v251, %v199
    %v264 = vmul.f32 %v251, %v200
    %v265 = vmul.f32 %v256, %v201
    %v266 = vmul.f32 %v256, %v202
    %v267 = vmul.f32 %v261, %v203
    %v268 = vmul.f32 %v261, %v204
    %269 = vset.pattern.permute.xlu0 1
    %270 = vperm.xlu0 %269, %v29
    %v271 = vpop.permute.xlu0 %270
    %273 = vset.pattern.permute.xlu0 1
    %274 = vperm.xlu0 %273, %v30
    %v275 = vpop.permute.xlu0 %274
    %277 = vset.pattern.permute.xlu0 1
    %278 = vperm.xlu0 %277, %v31
    %v279 = vpop.permute.xlu0 %278
    %v281 = vmul.f32 %v271, %v37
    %v282 = vmul.f32 %v271, %v38
    %v283 = vmul.f32 %v275, %v39
    %v284 = vmul.f32 %v275, %v40
    %v285 = vmul.f32 %v279, %v41
    %v286 = vmul.f32 %v279, %v42
    %v287 = vadd.f32 %v263, %v281
    %v288 = vadd.f32 %v264, %v282
    %v289 = vadd.f32 %v265, %v283
    %v290 = vadd.f32 %v266, %v284
    %v291 = vadd.f32 %v267, %v285
    %v292 = vadd.f32 %v268, %v286
    %293 = vset.pattern.permute.xlu0 2
    %294 = vperm.xlu0 %293, %v29
    %v295 = vpop.permute.xlu0 %294
    %297 = vset.pattern.permute.xlu0 2
    %298 = vperm.xlu0 %297, %v30
    %v299 = vpop.permute.xlu0 %298
    %301 = vset.pattern.permute.xlu0 2
    %302 = vperm.xlu0 %301, %v31
    %v303 = vpop.permute.xlu0 %302
    %v305 = vmul.f32 %v295, %v242
    %v306 = vmul.f32 %v295, %v243
    %v307 = vmul.f32 %v299, %v244
    %v308 = vmul.f32 %v299, %v245
    %v309 = vmul.f32 %v303, %v246
    %v310 = vmul.f32 %v303, %v247
    %v311 = vadd.f32 %v287, %v305
    %v312 = vadd.f32 %v288, %v306
    %v313 = vadd.f32 %v289, %v307
    %v314 = vadd.f32 %v290, %v308
    %v315 = vadd.f32 %v291, %v309
    %v316 = vadd.f32 %v292, %v310
    %317 = vset.pattern.permute.xlu0 3
    %318 = vperm.xlu0 %317, %v29
    %v319 = vpop.permute.xlu0 %318
    %321 = vset.pattern.permute.xlu0 3
    %322 = vperm.xlu0 %321, %v30
    %v323 = vpop.permute.xlu0 %322
    %325 = vset.pattern.permute.xlu0 3
    %326 = vperm.xlu0 %325, %v31
    %v327 = vpop.permute.xlu0 %326
    %v329 = vmul.f32 %v319, %v199
    %v330 = vmul.f32 %v319, %v200
    %v331 = vmul.f32 %v323, %v201
    %v332 = vmul.f32 %v323, %v202
    %v333 = vmul.f32 %v327, %v203
    %v334 = vmul.f32 %v327, %v204
    %335 = vset.pattern.permute.xlu0 4
    %336 = vperm.xlu0 %335, %v29
    %v337 = vpop.permute.xlu0 %336
    %339 = vset.pattern.permute.xlu0 4
    %340 = vperm.xlu0 %339, %v30
    %v341 = vpop.permute.xlu0 %340
    %343 = vset.pattern.permute.xlu0 4
    %344 = vperm.xlu0 %343, %v31
    %v345 = vpop.permute.xlu0 %344
    %v347 = vmul.f32 %v337, %v37
    %v348 = vmul.f32 %v337, %v38
    %v349 = vmul.f32 %v341, %v39
    %v350 = vmul.f32 %v341, %v40
    %v351 = vmul.f32 %v345, %v41
    %v352 = vmul.f32 %v345, %v42
    %v353 = vadd.f32 %v329, %v347
    %v354 = vadd.f32 %v330, %v348
    %v355 = vadd.f32 %v331, %v349
    %v356 = vadd.f32 %v332, %v350
    %v357 = vadd.f32 %v333, %v351
    %v358 = vadd.f32 %v334, %v352
    %359 = vset.pattern.permute.xlu0 5
    %360 = vperm.xlu0 %359, %v29
    %v361 = vpop.permute.xlu0 %360
    %363 = vset.pattern.permute.xlu0 5
    %364 = vperm.xlu0 %363, %v30
    %v365 = vpop.permute.xlu0 %364
    %367 = vset.pattern.permute.xlu0 5
    %368 = vperm.xlu0 %367, %v31
    %v369 = vpop.permute.xlu0 %368
    %v371 = vmul.f32 %v361, %v242
    %v372 = vmul.f32 %v361, %v243
    %v373 = vmul.f32 %v365, %v244
    %v374 = vmul.f32 %v365, %v245
    %v375 = vmul.f32 %v369, %v246
    %v376 = vmul.f32 %v369, %v247
    %v377 = vadd.f32 %v353, %v371
    %v378 = vadd.f32 %v354, %v372
    %v379 = vadd.f32 %v355, %v373
    %v380 = vadd.f32 %v356, %v374
    %v381 = vadd.f32 %v357, %v375
    %v382 = vadd.f32 %v358, %v376
    %383 = vset.pattern.permute.xlu0 6
    %384 = vperm.xlu0 %383, %v29
    %v385 = vpop.permute.xlu0 %384
    %387 = vset.pattern.permute.xlu0 6
    %388 = vperm.xlu0 %387, %v30
    %v389 = vpop.permute.xlu0 %388
    %391 = vset.pattern.permute.xlu0 6
    %392 = vperm.xlu0 %391, %v31
    %v393 = vpop.permute.xlu0 %392
    %v395 = vmul.f32 %v385, %v199
    %v396 = vmul.f32 %v385, %v200
    %v397 = vmul.f32 %v389, %v201
    %v398 = vmul.f32 %v389, %v202
    %v399 = vmul.f32 %v393, %v203
    %v400 = vmul.f32 %v393, %v204
    %401 = vset.pattern.permute.xlu0 7
    %402 = vperm.xlu0 %401, %v29
    %v403 = vpop.permute.xlu0 %402
    %405 = vset.pattern.permute.xlu0 7
    %406 = vperm.xlu0 %405, %v30
    %v407 = vpop.permute.xlu0 %406
    %409 = vset.pattern.permute.xlu0 7
    %410 = vperm.xlu0 %409, %v31
    %v411 = vpop.permute.xlu0 %410
    %v413 = vmul.f32 %v403, %v37
    %v414 = vmul.f32 %v403, %v38
    %v415 = vmul.f32 %v407, %v39
    %v416 = vmul.f32 %v407, %v40
    %v417 = vmul.f32 %v411, %v41
    %v418 = vmul.f32 %v411, %v42
    %v419 = vadd.f32 %v395, %v413
    %v420 = vadd.f32 %v396, %v414
    %v421 = vadd.f32 %v397, %v415
    %v422 = vadd.f32 %v398, %v416
    %v423 = vadd.f32 %v399, %v417
    %v424 = vadd.f32 %v400, %v418
    %425 = vset.pattern.permute.xlu0 8
    %426 = vperm.xlu0 %425, %v29
    %v427 = vpop.permute.xlu0 %426
    %429 = vset.pattern.permute.xlu0 8
    %430 = vperm.xlu0 %429, %v30
    %v431 = vpop.permute.xlu0 %430
    %433 = vset.pattern.permute.xlu0 8
    %434 = vperm.xlu0 %433, %v31
    %v435 = vpop.permute.xlu0 %434
    %v437 = vmul.f32 %v427, %v242
    %v438 = vmul.f32 %v427, %v243
    %v439 = vmul.f32 %v431, %v244
    %v440 = vmul.f32 %v431, %v245
    %v441 = vmul.f32 %v435, %v246
    %v442 = vmul.f32 %v435, %v247
    %v443 = vadd.f32 %v419, %v437
    %v444 = vadd.f32 %v420, %v438
    %v445 = vadd.f32 %v421, %v439
    %v446 = vadd.f32 %v422, %v440
    %v447 = vadd.f32 %v423, %v441
    %v448 = vadd.f32 %v424, %v442
    %452 = vrot.lane.b32.xlu0 %v156, 124
    %v453 = vpop.permute.xlu0 %452
    %454 = vrot.lane.b32.xlu0 %v157, 124
    %v455 = vpop.permute.xlu0 %454
    %456 = vrot.lane.b32.xlu0 %v158, 124
    %v457 = vpop.permute.xlu0 %456
    %v461 = vadd.f32 %v29, %v453
    %v462 = vadd.f32 %v30, %v455
    %v463 = vadd.f32 %v31, %v457
    %465 = vset.pattern.permute.xlu0 9
    %466 = vperm.xlu0 %465, %v461
    %v467 = vpop.permute.xlu0 %466
    %470 = vset.pattern.permute.xlu0 9
    %471 = vperm.xlu0 %470, %v462
    %v472 = vpop.permute.xlu0 %471
    %475 = vset.pattern.permute.xlu0 9
    %476 = vperm.xlu0 %475, %v463
    %v477 = vpop.permute.xlu0 %476
    %v479 = vadd.f32 %v467, %v377
    %v480 = vadd.f32 %v467, %v378
    %v481 = vadd.f32 %v472, %v379
    %v482 = vadd.f32 %v472, %v380
    %v483 = vadd.f32 %v477, %v381
    %v484 = vadd.f32 %v477, %v382
    %485 = vrot.lane.b32.xlu0 %v311, 16
    %v486 = vpop.permute.xlu0 %485
    %487 = vrot.lane.b32.xlu0 %v313, 16
    %v488 = vpop.permute.xlu0 %487
    %489 = vrot.lane.b32.xlu0 %v315, 16
    %v490 = vpop.permute.xlu0 %489
    %491 = vrot.lane.b32.xlu0 %v312, 16
    %v492 = vpop.permute.xlu0 %491
    %493 = vrot.lane.b32.xlu0 %v314, 16
    %v494 = vpop.permute.xlu0 %493
    %495 = vrot.lane.b32.xlu0 %v316, 16
    %v496 = vpop.permute.xlu0 %495
    %vm497 = vcmp.lt.s32.totalorder %v172, 16
    %v498 = vsel %vm497, %v486, %v492
    %v499 = vsel %vm497, %v488, %v494
    %v500 = vsel %vm497, %v490, %v496
    %v501 = vsel %vm497, %v492, %v486
    %v502 = vsel %vm497, %v494, %v488
    %v503 = vsel %vm497, %v496, %v490
    %v504 = vlaneseq
    %v505 = vshrl.u32 %v504, 7
    %v506 = vsub.s32 2, %v505
    %v507 = vrot.slane %v32, %v506
    %v508 = vlaneseq
    %v509 = vshrl.u32 %v508, 7
    %v510 = vsub.s32 6, %v509
    %v511 = vrot.slane %v32, %v510
    %v514 = vlaneseq
    %v515 = vshrl.u32 %v514, 7
    %v516 = vsub.s32 2, %v515
    %v517 = vrot.slane %v507, %v516
    %v518 = vlaneseq
    %v519 = vshrl.u32 %v518, 7
    %v520 = vsub.s32 2, %v519
    %v521 = vrot.slane %v511, %v520
    %v522 = vmul.f32 %v501, %v517
    %v523 = vmul.f32 %v498, %v521
    %v524 = vmul.f32 %v502, %v517
    %v525 = vmul.f32 %v499, %v521
    %v526 = vmul.f32 %v503, %v517
    %v527 = vmul.f32 %v500, %v521
    %v528 = vadd.f32 %v479, %v522
    %v529 = vadd.f32 %v480, %v523
    %v530 = vadd.f32 %v481, %v524
    %v531 = vadd.f32 %v482, %v525
    %v532 = vadd.f32 %v483, %v526
    %v533 = vadd.f32 %v484, %v527
    %534 = vrot.lane.b32.xlu0 %v443, 112
    %v535 = vpop.permute.xlu0 %534
    %536 = vrot.lane.b32.xlu0 %v445, 112
    %v537 = vpop.permute.xlu0 %536
    %538 = vrot.lane.b32.xlu0 %v447, 112
    %v539 = vpop.permute.xlu0 %538
    %540 = vrot.lane.b32.xlu0 %v444, 112
    %v541 = vpop.permute.xlu0 %540
    %542 = vrot.lane.b32.xlu0 %v446, 112
    %v543 = vpop.permute.xlu0 %542
    %544 = vrot.lane.b32.xlu0 %v448, 112
    %v545 = vpop.permute.xlu0 %544
    %vm546 = vcmp.lt.s32.totalorder %v172, 112
    %v547 = vsel %vm546, %v535, %v541
    %v548 = vsel %vm546, %v537, %v543
    %v549 = vsel %vm546, %v539, %v545
    %v550 = vsel %vm546, %v541, %v535
    %v551 = vsel %vm546, %v543, %v537
    %v552 = vsel %vm546, %v545, %v539
    %v553 = vlaneseq
    %v554 = vshrl.u32 %v553, 7
    %v555 = vsub.s32 3, %v554
    %v556 = vrot.slane %v32, %v555
    %v557 = vlaneseq
    %v558 = vshrl.u32 %v557, 7
    %v559 = vsub.s32 7, %v558
    %v560 = vrot.slane %v32, %v559
    %v563 = vlaneseq
    %v564 = vshrl.u32 %v563, 7
    %v565 = vsub.s32 3, %v564
    %v566 = vrot.slane %v556, %v565
    %v567 = vlaneseq
    %v568 = vshrl.u32 %v567, 7
    %v569 = vsub.s32 3, %v568
    %v570 = vrot.slane %v560, %v569
    %v571 = vmul.f32 %v547, %v566
    %v572 = vmul.f32 %v550, %v570
    %v573 = vmul.f32 %v548, %v566
    %v574 = vmul.f32 %v551, %v570
    %v575 = vmul.f32 %v549, %v566
    %v576 = vmul.f32 %v552, %v570
    %v577 = vadd.f32 %v528, %v571
    %v578 = vadd.f32 %v529, %v572
    %v579 = vadd.f32 %v530, %v573
    %v580 = vadd.f32 %v531, %v574
    %v581 = vadd.f32 %v532, %v575
    %v582 = vadd.f32 %v533, %v576
    %583 = vst [vmem:[#allocation5] sm:$0xff] %v577
    %584 = vst [vmem:[#allocation5 + $0x8] sm:$0xff] %v578
    %585 = vst [vmem:[#allocation5 + $0x10] sm:$0xff] %v579
    %586 = vst [vmem:[#allocation5 + $0x18] sm:$0xff] %v580
    %587 = vst [vmem:[#allocation5 + $0x20] sm:$0xff] %v581
    %588 = vst [vmem:[#allocation5 + $0x28] sm:$0xff] %v582
    %s589 = scalar_lea.vmem [#allocation2], 48
    %v590 = vld [vmem:[%s589] sm:$0xff]
    %v591 = vld [vmem:[%s589 + $0x8] sm:$0xff]
    %v592 = vld [vmem:[%s589 + $0x10] sm:$0xff]
    %v593 = vld [vmem:[%s589 + $0x18] sm:$0xff]
    %v594 = vld [vmem:[%s589 + $0x20] sm:$0xff]
    %v595 = vld [vmem:[%s589 + $0x28] sm:$0xff]
    %v596 = vadd.f32 %v590, %v591
    %597 = vadd.xlane.f32.xlu0 %v596
    %v598 = vpop.xlane.xlu0 %597
    %v599 = vadd.f32 %v592, %v593
    %600 = vadd.xlane.f32.xlu0 %v599
    %v601 = vpop.xlane.xlu0 %600
    %v602 = vadd.f32 %v594, %v595
    %603 = vadd.xlane.f32.xlu0 %v602
    %v604 = vpop.xlane.xlu0 %603
    %v605 = vmul.f32 %v598, 0.00390625
    %v606 = vmul.f32 %v601, 0.00390625
    %v607 = vmul.f32 %v604, 0.00390625
    %v608 = vrot.slane %v605, 7
    %v609 = vrot.slane %v606, 7
    %v610 = vrot.slane %v607, 7
    %v611 = vsel %vm58, %v609, %v610
    %v612 = vsel %vm58, %v608, %v609
    %v613 = vsel %vm58, %v610, %v608
    %v614 = vsel %vm62, %v613, 0.0
    %v615 = vsel %vm63, %v612, 0.0
    %v616 = vsel %vm64, %v611, 0.0
    %620 = vrot.lane.b32.xlu0 %v614, 10
    %v621 = vpop.permute.xlu0 %620
    %622 = vrot.lane.b32.xlu0 %v615, 10
    %v623 = vpop.permute.xlu0 %622
    %624 = vrot.lane.b32.xlu0 %v616, 10
    %v625 = vpop.permute.xlu0 %624
    %v629 = vmul.f32 %v29, %v621
    %v630 = vmul.f32 %v30, %v623
    %v631 = vmul.f32 %v31, %v625
    %635 = vrot.lane.b32.xlu0 %v629, 3
    %v636 = vpop.permute.xlu0 %635
    %637 = vrot.lane.b32.xlu0 %v630, 3
    %v638 = vpop.permute.xlu0 %637
    %639 = vrot.lane.b32.xlu0 %v631, 3
    %v640 = vpop.permute.xlu0 %639
    %v644 = vadd.f32 %v29, %v636
    %v645 = vadd.f32 %v30, %v638
    %v646 = vadd.f32 %v31, %v640
    %v647 = vmul.f32 %v29, %v605
    %v648 = vmul.f32 %v30, %v606
    %v649 = vmul.f32 %v31, %v607
    %653 = vrot.lane.b32.xlu0 %v647, 2
    %v654 = vpop.permute.xlu0 %653
    %655 = vrot.lane.b32.xlu0 %v648, 2
    %v656 = vpop.permute.xlu0 %655
    %657 = vrot.lane.b32.xlu0 %v649, 2
    %v658 = vpop.permute.xlu0 %657
    %v662 = vadd.f32 %v644, %v654
    %v663 = vadd.f32 %v645, %v656
    %v664 = vadd.f32 %v646, %v658
    %v665 = vrot.slane %v605, 1
    %v666 = vrot.slane %v606, 1
    %v667 = vrot.slane %v607, 1
    %v668 = vsel %vm119, %v666, %v667
    %v669 = vsel %vm119, %v665, %v666
    %v670 = vsel %vm119, %v667, %v665
    %v671 = vsel %vm123, %v669, 0.0
    %v672 = vsel %vm124, %v668, 0.0
    %v673 = vsel %vm125, %v670, 0.0
    %677 = vrot.lane.b32.xlu0 %v671, 12
    %v678 = vpop.permute.xlu0 %677
    %679 = vrot.lane.b32.xlu0 %v672, 12
    %v680 = vpop.permute.xlu0 %679
    %681 = vrot.lane.b32.xlu0 %v673, 12
    %v682 = vpop.permute.xlu0 %681
    %v686 = vmul.f32 %v29, %v678
    %v687 = vmul.f32 %v30, %v680
    %v688 = vmul.f32 %v31, %v682
    %692 = vrot.lane.b32.xlu0 %v686, 1
    %v693 = vpop.permute.xlu0 %692
    %694 = vrot.lane.b32.xlu0 %v687, 1
    %v695 = vpop.permute.xlu0 %694
    %696 = vrot.lane.b32.xlu0 %v688, 1
    %v697 = vpop.permute.xlu0 %696
    %v701 = vadd.f32 %v662, %v693
    %v702 = vadd.f32 %v663, %v695
    %v703 = vadd.f32 %v664, %v697
    %704 = vrot.lane.b32.xlu0 %v590, 1
    %v705 = vpop.permute.xlu0 %704
    %706 = vrot.lane.b32.xlu0 %v592, 1
    %v707 = vpop.permute.xlu0 %706
    %708 = vrot.lane.b32.xlu0 %v594, 1
    %v709 = vpop.permute.xlu0 %708
    %710 = vrot.lane.b32.xlu0 %v591, 1
    %v711 = vpop.permute.xlu0 %710
    %712 = vrot.lane.b32.xlu0 %v593, 1
    %v713 = vpop.permute.xlu0 %712
    %714 = vrot.lane.b32.xlu0 %v595, 1
    %v715 = vpop.permute.xlu0 %714
    %v716 = vsel %vm173, %v705, %v711
    %v717 = vsel %vm173, %v707, %v713
    %v718 = vsel %vm173, %v709, %v715
    %v719 = vsel %vm173, %v711, %v705
    %v720 = vsel %vm173, %v713, %v707
    %v721 = vsel %vm173, %v715, %v709
    %v722 = vmul.f32 %v719, %v194
    %v723 = vmul.f32 %v716, %v198
    %v724 = vmul.f32 %v720, %v194
    %v725 = vmul.f32 %v717, %v198
    %v726 = vmul.f32 %v721, %v194
    %v727 = vmul.f32 %v718, %v198
    %728 = vrot.lane.b32.xlu0 %v590, 127
    %v729 = vpop.permute.xlu0 %728
    %730 = vrot.lane.b32.xlu0 %v592, 127
    %v731 = vpop.permute.xlu0 %730
    %732 = vrot.lane.b32.xlu0 %v594, 127
    %v733 = vpop.permute.xlu0 %732
    %734 = vrot.lane.b32.xlu0 %v591, 127
    %v735 = vpop.permute.xlu0 %734
    %736 = vrot.lane.b32.xlu0 %v593, 127
    %v737 = vpop.permute.xlu0 %736
    %738 = vrot.lane.b32.xlu0 %v595, 127
    %v739 = vpop.permute.xlu0 %738
    %v740 = vsel %vm217, %v729, %v735
    %v741 = vsel %vm217, %v731, %v737
    %v742 = vsel %vm217, %v733, %v739
    %v743 = vsel %vm217, %v735, %v729
    %v744 = vsel %vm217, %v737, %v731
    %v745 = vsel %vm217, %v739, %v733
    %v746 = vmul.f32 %v740, %v237
    %v747 = vmul.f32 %v743, %v241
    %v748 = vmul.f32 %v741, %v237
    %v749 = vmul.f32 %v744, %v241
    %v750 = vmul.f32 %v742, %v237
    %v751 = vmul.f32 %v745, %v241
    %v752 = vmul.f32 %v251, %v722
    %v753 = vmul.f32 %v251, %v723
    %v754 = vmul.f32 %v256, %v724
    %v755 = vmul.f32 %v256, %v725
    %v756 = vmul.f32 %v261, %v726
    %v757 = vmul.f32 %v261, %v727
    %v758 = vmul.f32 %v271, %v590
    %v759 = vmul.f32 %v271, %v591
    %v760 = vmul.f32 %v275, %v592
    %v761 = vmul.f32 %v275, %v593
    %v762 = vmul.f32 %v279, %v594
    %v763 = vmul.f32 %v279, %v595
    %v764 = vadd.f32 %v752, %v758
    %v765 = vadd.f32 %v753, %v759
    %v766 = vadd.f32 %v754, %v760
    %v767 = vadd.f32 %v755, %v761
    %v768 = vadd.f32 %v756, %v762
    %v769 = vadd.f32 %v757, %v763
    %v770 = vmul.f32 %v295, %v746
    %v771 = vmul.f32 %v295, %v747
    %v772 = vmul.f32 %v299, %v748
    %v773 = vmul.f32 %v299, %v749
    %v774 = vmul.f32 %v303, %v750
    %v775 = vmul.f32 %v303, %v751
    %v776 = vadd.f32 %v764, %v770
    %v777 = vadd.f32 %v765, %v771
    %v778 = vadd.f32 %v766, %v772
    %v779 = vadd.f32 %v767, %v773
    %v780 = vadd.f32 %v768, %v774
    %v781 = vadd.f32 %v769, %v775
    %v782 = vmul.f32 %v319, %v722
    %v783 = vmul.f32 %v319, %v723
    %v784 = vmul.f32 %v323, %v724
    %v785 = vmul.f32 %v323, %v725
    %v786 = vmul.f32 %v327, %v726
    %v787 = vmul.f32 %v327, %v727
    %v788 = vmul.f32 %v337, %v590
    %v789 = vmul.f32 %v337, %v591
    %v790 = vmul.f32 %v341, %v592
    %v791 = vmul.f32 %v341, %v593
    %v792 = vmul.f32 %v345, %v594
    %v793 = vmul.f32 %v345, %v595
    %v794 = vadd.f32 %v782, %v788
    %v795 = vadd.f32 %v783, %v789
    %v796 = vadd.f32 %v784, %v790
    %v797 = vadd.f32 %v785, %v791
    %v798 = vadd.f32 %v786, %v792
    %v799 = vadd.f32 %v787, %v793
    %v800 = vmul.f32 %v361, %v746
    %v801 = vmul.f32 %v361, %v747
    %v802 = vmul.f32 %v365, %v748
    %v803 = vmul.f32 %v365, %v749
    %v804 = vmul.f32 %v369, %v750
    %v805 = vmul.f32 %v369, %v751
    %v806 = vadd.f32 %v794, %v800
    %v807 = vadd.f32 %v795, %v801
    %v808 = vadd.f32 %v796, %v802
    %v809 = vadd.f32 %v797, %v803
    %v810 = vadd.f32 %v798, %v804
    %v811 = vadd.f32 %v799, %v805
    %v812 = vmul.f32 %v385, %v722
    %v813 = vmul.f32 %v385, %v723
    %v814 = vmul.f32 %v389, %v724
    %v815 = vmul.f32 %v389, %v725
    %v816 = vmul.f32 %v393, %v726
    %v817 = vmul.f32 %v393, %v727
    %v818 = vmul.f32 %v403, %v590
    %v819 = vmul.f32 %v403, %v591
    %v820 = vmul.f32 %v407, %v592
    %v821 = vmul.f32 %v407, %v593
    %v822 = vmul.f32 %v411, %v594
    %v823 = vmul.f32 %v411, %v595
    %v824 = vadd.f32 %v812, %v818
    %v825 = vadd.f32 %v813, %v819
    %v826 = vadd.f32 %v814, %v820
    %v827 = vadd.f32 %v815, %v821
    %v828 = vadd.f32 %v816, %v822
    %v829 = vadd.f32 %v817, %v823
    %v830 = vmul.f32 %v427, %v746
    %v831 = vmul.f32 %v427, %v747
    %v832 = vmul.f32 %v431, %v748
    %v833 = vmul.f32 %v431, %v749
    %v834 = vmul.f32 %v435, %v750
    %v835 = vmul.f32 %v435, %v751
    %v836 = vadd.f32 %v824, %v830
    %v837 = vadd.f32 %v825, %v831
    %v838 = vadd.f32 %v826, %v832
    %v839 = vadd.f32 %v827, %v833
    %v840 = vadd.f32 %v828, %v834
    %v841 = vadd.f32 %v829, %v835
    %845 = vrot.lane.b32.xlu0 %v701, 124
    %v846 = vpop.permute.xlu0 %845
    %847 = vrot.lane.b32.xlu0 %v702, 124
    %v848 = vpop.permute.xlu0 %847
    %849 = vrot.lane.b32.xlu0 %v703, 124
    %v850 = vpop.permute.xlu0 %849
    %v854 = vadd.f32 %v29, %v846
    %v855 = vadd.f32 %v30, %v848
    %v856 = vadd.f32 %v31, %v850
    %858 = vset.pattern.permute.xlu0 9
    %859 = vperm.xlu0 %858, %v854
    %v860 = vpop.permute.xlu0 %859
    %863 = vset.pattern.permute.xlu0 9
    %864 = vperm.xlu0 %863, %v855
    %v865 = vpop.permute.xlu0 %864
    %868 = vset.pattern.permute.xlu0 9
    %869 = vperm.xlu0 %868, %v856
    %v870 = vpop.permute.xlu0 %869
    %v872 = vadd.f32 %v860, %v806
    %v873 = vadd.f32 %v860, %v807
    %v874 = vadd.f32 %v865, %v808
    %v875 = vadd.f32 %v865, %v809
    %v876 = vadd.f32 %v870, %v810
    %v877 = vadd.f32 %v870, %v811
    %878 = vrot.lane.b32.xlu0 %v776, 16
    %v879 = vpop.permute.xlu0 %878
    %880 = vrot.lane.b32.xlu0 %v778, 16
    %v881 = vpop.permute.xlu0 %880
    %882 = vrot.lane.b32.xlu0 %v780, 16
    %v883 = vpop.permute.xlu0 %882
    %884 = vrot.lane.b32.xlu0 %v777, 16
    %v885 = vpop.permute.xlu0 %884
    %886 = vrot.lane.b32.xlu0 %v779, 16
    %v887 = vpop.permute.xlu0 %886
    %888 = vrot.lane.b32.xlu0 %v781, 16
    %v889 = vpop.permute.xlu0 %888
    %v890 = vsel %vm497, %v879, %v885
    %v891 = vsel %vm497, %v881, %v887
    %v892 = vsel %vm497, %v883, %v889
    %v893 = vsel %vm497, %v885, %v879
    %v894 = vsel %vm497, %v887, %v881
    %v895 = vsel %vm497, %v889, %v883
    %v896 = vmul.f32 %v893, %v517
    %v897 = vmul.f32 %v890, %v521
    %v898 = vmul.f32 %v894, %v517
    %v899 = vmul.f32 %v891, %v521
    %v900 = vmul.f32 %v895, %v517
    %v901 = vmul.f32 %v892, %v521
    %v902 = vadd.f32 %v872, %v896
    %v903 = vadd.f32 %v873, %v897
    %v904 = vadd.f32 %v874, %v898
    %v905 = vadd.f32 %v875, %v899
    %v906 = vadd.f32 %v876, %v900
    %v907 = vadd.f32 %v877, %v901
    %908 = vrot.lane.b32.xlu0 %v836, 112
    %v909 = vpop.permute.xlu0 %908
    %910 = vrot.lane.b32.xlu0 %v838, 112
    %v911 = vpop.permute.xlu0 %910
    %912 = vrot.lane.b32.xlu0 %v840, 112
    %v913 = vpop.permute.xlu0 %912
    %914 = vrot.lane.b32.xlu0 %v837, 112
    %v915 = vpop.permute.xlu0 %914
    %916 = vrot.lane.b32.xlu0 %v839, 112
    %v917 = vpop.permute.xlu0 %916
    %918 = vrot.lane.b32.xlu0 %v841, 112
    %v919 = vpop.permute.xlu0 %918
    %v920 = vsel %vm546, %v909, %v915
    %v921 = vsel %vm546, %v911, %v917
    %v922 = vsel %vm546, %v913, %v919
    %v923 = vsel %vm546, %v915, %v909
    %v924 = vsel %vm546, %v917, %v911
    %v925 = vsel %vm546, %v919, %v913
    %v926 = vmul.f32 %v920, %v566
    %v927 = vmul.f32 %v923, %v570
    %v928 = vmul.f32 %v921, %v566
    %v929 = vmul.f32 %v924, %v570
    %v930 = vmul.f32 %v922, %v566
    %v931 = vmul.f32 %v925, %v570
    %v932 = vadd.f32 %v902, %v926
    %v933 = vadd.f32 %v903, %v927
    %v934 = vadd.f32 %v904, %v928
    %v935 = vadd.f32 %v905, %v929
    %v936 = vadd.f32 %v906, %v930
    %v937 = vadd.f32 %v907, %v931
    %s938 = scalar_lea.vmem [#allocation5], 48
    %939 = vst [vmem:[%s938] sm:$0xff] %v932
    %940 = vst [vmem:[%s938 + $0x8] sm:$0xff] %v933
    %941 = vst [vmem:[%s938 + $0x10] sm:$0xff] %v934
    %942 = vst [vmem:[%s938 + $0x18] sm:$0xff] %v935
    %943 = vst [vmem:[%s938 + $0x20] sm:$0xff] %v936
    %944 = vst [vmem:[%s938 + $0x28] sm:$0xff] %v937
    // Predicated region
    $region18: #{tpu_custom_call.1} parent=1 // pred_check
      _
    $region19: #{tpu_custom_call.1} parent=1 // pred_check_branch
      %946 = sbr.rel (0) target = $region21
    $region20: #{tpu_custom_call.1} parent=1 // pred_region
      %s948 = ssub.s32 1536, 1536
      %949 = vsyncadd [#allocation4], %s948
      %s950 = sshll.u32 [#allocation5], 4
      %s951 = int_to_ptr.vmem [resolvable:$true] %s950
      %956 = dma.vmem_to_hbm [thread:$0]  %s951, 1536, %s3, [#allocation4], 256, 256, 16
    $region21: #{tpu_custom_call.1} parent=1 // pred_fallthru
      _
    // Predicated region
    $region22: #{tpu_custom_call.1} parent=1 // pred_check
      _
    $region23: #{tpu_custom_call.1} parent=1 // pred_check_branch
      %958 = sbr.rel (0) target = $region25
    $region24: #{tpu_custom_call.1} parent=1 // pred_region
      %959 = dma.done [#allocation4], 1536
    $region25: #{tpu_custom_call.1} parent=1 // pred_fallthru
      _
    %960 = vsyncpa [#allocation3], 1
    %961 = vsyncpa [#allocation4], 1

</llo_original>
